<compile_context>
chip_gen: v7x
topology: tpu7x:2x2x1
jax: 0.10.0
libtpu: 0.0.40
codegen_flags: <defaults>
</compile_context>

<pallas_src>
import functools

import jax
import jax.numpy as jnp
from jax.experimental import pallas as pl
from jax.experimental.pallas import tpu as pltpu


# Default row-tile.  Feature dims here (32/64/8) all pad to 128 lanes; at
# TILE_N=4096 the streamed blocks + padded f32 temps are ~25-30 MiB worst case,
# within the 64 MiB limit requested below (v7x physical VMEM is 64 MiB; drop
# tile_n to 2048 there if the compiler complains).
_DEFAULT_TILE_N = 4096
_VMEM_LIMIT_BYTES = 64 * 1024 * 1024
_N_SPLIT = 2  # leading "parallel" grid axis for the loss kernel (v7x megacore)


def _round_up(a, b):
    return ((a + b - 1) // b) * b


# ----------------------------------------------------------------------------
# Kernels
# ----------------------------------------------------------------------------
def _mlp_loss_kernel(x_ref, y_ref, w1_ref, b1_ref, w2_ref, b2_ref,
                     sum_ref, cnt_ref):
    # Grid = (core_split, row_steps).  sum_ref / cnt_ref are this core's
    # (1,1,128) partial blocks, VMEM-resident across the inner axis.
    i = pl.program_id(1)

    @pl.when(i == 0)
    def _():
        sum_ref[...] = jnp.zeros_like(sum_ref)
        cnt_ref[...] = jnp.zeros_like(cnt_ref)

    # ---- MLP hot path (MXU, bf16 in / f32 accumulate) ----
    x = x_ref[...]                                                  # [T, D_in] bf16
    h = jnp.dot(x, w1_ref[...], preferred_element_type=jnp.float32) + b1_ref[...]
    h = jnp.maximum(h, 0.0).astype(jnp.bfloat16)                    # ReLU
    logits = jnp.dot(h, w2_ref[...], preferred_element_type=jnp.float32) + b2_ref[...]

    # ---- fused masked NLL (f32), trimmed temporaries ----
    m = jnp.max(logits, axis=-1, keepdims=True)
    z = logits - m                                                  # [T, C]
    lse = jnp.log(jnp.sum(jnp.exp(z), axis=-1, keepdims=True))      # [T, 1]

    y = y_ref[...]                                                  # [T, 1] int32
    col = jax.lax.broadcasted_iota(jnp.int32, logits.shape, 1)
    t = jnp.sum(jnp.where(col == y, z, 0.0), axis=-1, keepdims=True)  # z at label

    valid = y >= 0                                                  # [T, 1] bool
    nll = jnp.where(valid, lse - t, 0.0)                            # -logp[label]

    # Splat-accumulate the per-tile scalars into this core's partial block.
    sum_ref[...] += jnp.sum(nll)
    cnt_ref[...] += jnp.sum(jnp.where(valid, 1.0, 0.0))


def _mlp_logits_kernel(x_ref, w1_ref, b1_ref, w2_ref, b2_ref, out_ref):
    h = jnp.dot(x_ref[...], w1_ref[...], preferred_element_type=jnp.float32) + b1_ref[...]
    h = jnp.maximum(h, 0.0).astype(jnp.bfloat16)
    out_ref[...] = (
        jnp.dot(h, w2_ref[...], preferred_element_type=jnp.float32) + b2_ref[...]
    )


# ----------------------------------------------------------------------------
# Wrappers
# ----------------------------------------------------------------------------
def _const_spec(shape, grid_rank):
    # Weight / bias blocks: full array, constant block index so Pallas DMAs
    # them once and keeps them resident across the whole grid.
    zeros = (0,) * len(shape)
    if grid_rank == 1:
        return pl.BlockSpec(shape, lambda i: zeros)
    return pl.BlockSpec(shape, lambda c, i: zeros)


@functools.partial(jax.jit, static_argnames=("tile_n",))
def classifier_loss(x, y, w1, b1, w2, b2, tile_n=_DEFAULT_TILE_N):
    """x: [..., D_in] float, y: [...] int32 (label < 0 => masked out)."""
    d_in = x.shape[-1]
    x2 = x.reshape(-1, d_in)
    y2 = y.reshape(-1, 1).astype(jnp.int32)
    n = x2.shape[0]
    hid = w1.shape[1]
    c = w2.shape[1]

    # Row tile: multiple of 16 (bf16 sublane tile).  Pad N up to a multiple of
    # _N_SPLIT * tile so the (core, step) grid covers it exactly.  Pad rows get
    # label -1 (and zero features) so the validity mask makes them exact no-ops.
    tile = min(_round_up(tile_n, 16), _round_up(n, 16))
    n_pad = _round_up(n, _N_SPLIT * tile)
    if n_pad != n:
        x2 = jnp.pad(x2, ((0, n_pad - n), (0, 0)))
        y2 = jnp.pad(y2, ((0, n_pad - n), (0, 0)), constant_values=-1)
    n_steps = n_pad // (_N_SPLIT * tile)

    x2 = x2.astype(jnp.bfloat16)
    w1b = w1.astype(jnp.bfloat16)
    w2b = w2.astype(jnp.bfloat16)
    b1f = b1.reshape(1, -1).astype(jnp.float32)
    b2f = b2.reshape(1, -1).astype(jnp.float32)

    def row_map(ci, ii):
        return (ci * n_steps + ii, 0)

    loss_sum, valid_cnt = pl.pallas_call(
        _mlp_loss_kernel,
        out_shape=(
            jax.ShapeDtypeStruct((_N_SPLIT, 1, 128), jnp.float32),   # per-core sum
            jax.ShapeDtypeStruct((_N_SPLIT, 1, 128), jnp.float32),   # per-core count
        ),
        grid=(_N_SPLIT, n_steps),
        in_specs=[
            pl.BlockSpec((tile, d_in), row_map),            # x  (streamed)
            pl.BlockSpec((tile, 1), row_map),               # y  (streamed)
            _const_spec((d_in, hid), 2),                    # W1 (resident)
            _const_spec((1, hid), 2),                       # b1
            _const_spec((hid, c), 2),                       # W2
            _const_spec((1, c), 2),                         # b2
        ],
        out_specs=(
            pl.BlockSpec((1, 1, 128), lambda ci, ii: (ci, 0, 0)),
            pl.BlockSpec((1, 1, 128), lambda ci, ii: (ci, 0, 0)),
        ),
        compiler_params=pltpu.CompilerParams(
            # Leading axis shards across TensorCores on v7x; inner axis is the
            # accumulation loop.
            dimension_semantics=("parallel", "arbitrary"),
            vmem_limit_bytes=_VMEM_LIMIT_BYTES,
        ),
    )(x2, y2, w1b, b1f, w2b, b2f)

    # CrossEntropy: loss.mean(0).sum()  ==  sum(per_row) / n_valid
    # (0/0 -> NaN when every label is masked, matching PyTorch on empty input.)
    return jnp.sum(loss_sum[:, 0, 0]) / jnp.sum(valid_cnt[:, 0, 0])


@functools.partial(jax.jit, static_argnames=("tile_n",))
def classifier_logits(x, w1, b1, w2, b2, tile_n=_DEFAULT_TILE_N):
    """y=None path: return the MLP output, same leading shape as x."""
    d_in = x.shape[-1]
    lead = x.shape[:-1]
    x2 = x.reshape(-1, d_in)
    n = x2.shape[0]
    hid = w1.shape[1]
    c = w2.shape[1]

    tile = min(_round_up(tile_n, 16), _round_up(n, 16))
    n_pad = _round_up(n, tile)
    if n_pad != n:
        x2 = jnp.pad(x2, ((0, n_pad - n), (0, 0)))

    x2 = x2.astype(jnp.bfloat16)
    w1b = w1.astype(jnp.bfloat16)
    w2b = w2.astype(jnp.bfloat16)
    b1f = b1.reshape(1, -1).astype(jnp.float32)
    b2f = b2.reshape(1, -1).astype(jnp.float32)

    # TODO(synk): output last dim C=8 (<128 lanes) still does masked partial
    # stores; a lane-dense repacked (n_pad//16, 128) output slab (and/or bf16
    # output) would cut writeback cost further.
    out = pl.pallas_call(
        _mlp_logits_kernel,
        out_shape=jax.ShapeDtypeStruct((n_pad, c), jnp.float32),
        grid=(n_pad // tile,),
        in_specs=[
            pl.BlockSpec((tile, d_in), lambda i: (i, 0)),   # x (streamed)
            _const_spec((d_in, hid), 1),
            _const_spec((1, hid), 1),
            _const_spec((hid, c), 1),
            _const_spec((1, c), 1),
        ],
        out_specs=pl.BlockSpec((tile, c), lambda i: (i, 0)),
        compiler_params=pltpu.CompilerParams(
            dimension_semantics=("parallel",),              # independent row tiles
            vmem_limit_bytes=_VMEM_LIMIT_BYTES,
        ),
    )(x2, w1b, b1f, w2b, b2f)
    return out[:n].reshape(*lead, c)


# ----------------------------------------------------------------------------
# Main
# ----------------------------------------------------------------------------
if __name__ == "__main__":
    # Small shapes implied by the module: in_dim=32, hiddens=[64], out_dim=8.
    B, S, D_IN, HID, C = 2, 8, 32, 64, 8

    key = jax.random.PRNGKey(0)
    kx, ky, kw1, kb1, kw2, kb2 = jax.random.split(key, 6)

    # Inputs
    x = jax.random.normal(kx, (B, S, D_IN), dtype=jnp.float32)
    y = jax.random.randint(ky, (B, S), minval=-1, maxval=C, dtype=jnp.int32)  # -1 => masked

    # Deterministic parameter init (Linear weights stored as [D_in, D_out]).
    w1 = jax.random.normal(kw1, (D_IN, HID), dtype=jnp.float32) * 0.1
    b1 = jax.random.normal(kb1, (1, HID), dtype=jnp.float32) * 0.01
    w2 = jax.random.normal(kw2, (HID, C), dtype=jnp.float32) * 0.1
    b2 = jax.random.normal(kb2, (1, C), dtype=jnp.float32) * 0.01

    # y provided -> masked cross-entropy loss
    loss = classifier_loss(x, y, w1, b1, w2, b2)
    jax.block_until_ready(loss)

    # y=None path -> raw logits
    logits = classifier_logits(x, w1, b1, w2, b2)
    jax.block_until_ready(logits)

    # Pure-JAX reference (same bf16 matmul inputs / f32 accumulation).
    x2r = x.reshape(-1, D_IN).astype(jnp.bfloat16)
    y2r = y.reshape(-1)
    w1b = w1.astype(jnp.bfloat16)
    w2b = w2.astype(jnp.bfloat16)
    h_ref = jnp.maximum(
        jnp.dot(x2r, w1b, preferred_element_type=jnp.float32) + b1, 0.0
    )
    lg = jnp.dot(h_ref.astype(jnp.bfloat16), w2b,
                 preferred_element_type=jnp.float32) + b2
    logp = jax.nn.log_softmax(lg, axis=-1)
    valid = y2r >= 0
    nll = -jnp.take_along_axis(logp, jnp.clip(y2r, 0)[:, None], axis=-1)[:, 0]
    ref_loss = jnp.sum(jnp.where(valid, nll, 0.0)) / jnp.sum(valid)

    assert jnp.allclose(loss, ref_loss, rtol=1e-3, atol=1e-3), (loss, ref_loss)
    assert jnp.allclose(logits.reshape(-1, C), lg, rtol=1e-3, atol=1e-3)

    print("KERNEL_OK")
</pallas_src>

<mosaic_0001>
module attributes {stable_mosaic.version = 11 : i64} {
  func.func @_mlp_loss_kernel(%arg0: i32, %arg1: i32, %arg2: memref<16x32xbf16, #tpu.memory_space<vmem>>, %arg3: memref<16x1xi32, #tpu.memory_space<vmem>>, %arg4: memref<32x64xbf16, #tpu.memory_space<vmem>>, %arg5: memref<1x64xf32, #tpu.memory_space<vmem>>, %arg6: memref<64x8xbf16, #tpu.memory_space<vmem>>, %arg7: memref<1x8xf32, #tpu.memory_space<vmem>>, %arg8: memref<1x1x128xf32, #tpu.memory_space<vmem>>, %arg9: memref<1x1x128xf32, #tpu.memory_space<vmem>>) attributes {dimension_semantics = [#tpu.dimension_semantics<parallel>, #tpu.dimension_semantics<arbitrary>], iteration_bounds = array<i64: 2, 1>, scalar_prefetch = 0 : i64, scratch_operands = 0 : i64, tpu.core_type = #tpu.core_type<tc>, window_params = [{transform_indices = @transform_0, window_bounds = array<i64: 16, 32>}, {transform_indices = @transform_1, window_bounds = array<i64: 16, 1>}, {pipeline_mode = #tpu.pipeline_mode<synchronous>, transform_indices = @transform_2, window_bounds = array<i64: 32, 64>}, {pipeline_mode = #tpu.pipeline_mode<synchronous>, transform_indices = @transform_3, window_bounds = array<i64: 1, 64>}, {pipeline_mode = #tpu.pipeline_mode<synchronous>, transform_indices = @transform_4, window_bounds = array<i64: 64, 8>}, {pipeline_mode = #tpu.pipeline_mode<synchronous>, transform_indices = @transform_5, window_bounds = array<i64: 1, 8>}, {transform_indices = @transform_6, window_bounds = array<i64: 1, 1, 128>}, {transform_indices = @transform_7, window_bounds = array<i64: 1, 1, 128>}]} {
    %c0_i32 = arith.constant 0 : i32
    %0 = arith.cmpi eq, %arg1, %c0_i32 : i32
    %1 = arith.extui %0 : i1 to i32
    %c0_i32_0 = arith.constant 0 : i32
    %2 = arith.cmpi ne, %1, %c0_i32_0 : i32
    scf.if %2 {
      %cst_36 = arith.constant 0.000000e+00 : f32
      %57 = vector.broadcast %cst_36 : f32 to vector<1x1x128xf32>
      %c0_37 = arith.constant 0 : index
      %c0_38 = arith.constant 0 : index
      %c0_39 = arith.constant 0 : index
      %58 = vector.load %arg8[%c0_37, %c0_38, %c0_39] : memref<1x1x128xf32, #tpu.memory_space<vmem>>, vector<1x1x128xf32>
      tpu.vector_store %arg8[%c0_37, %c0_38, %c0_39], %57 {strides = array<i32>} : memref<1x1x128xf32, #tpu.memory_space<vmem>>, vector<1x1x128xf32>,
      %cst_40 = arith.constant 0.000000e+00 : f32
      %59 = vector.broadcast %cst_40 : f32 to vector<1x1x128xf32>
      %c0_41 = arith.constant 0 : index
      %c0_42 = arith.constant 0 : index
      %c0_43 = arith.constant 0 : index
      %60 = vector.load %arg9[%c0_41, %c0_42, %c0_43] : memref<1x1x128xf32, #tpu.memory_space<vmem>>, vector<1x1x128xf32>
      tpu.vector_store %arg9[%c0_41, %c0_42, %c0_43], %59 {strides = array<i32>} : memref<1x1x128xf32, #tpu.memory_space<vmem>>, vector<1x1x128xf32>,
    } else {
    }
    %c0 = arith.constant 0 : index
    %c0_1 = arith.constant 0 : index
    %3 = vector.load %arg2[%c0, %c0_1] : memref<16x32xbf16, #tpu.memory_space<vmem>>, vector<16x32xbf16>
    %c0_2 = arith.constant 0 : index
    %c0_3 = arith.constant 0 : index
    %4 = vector.load %arg4[%c0_2, %c0_3] : memref<32x64xbf16, #tpu.memory_space<vmem>>, vector<32x64xbf16>
    %cst = arith.constant dense<0.000000e+00> : vector<16x64xf32>
    %5 = tpu.matmul %3, %4, %cst {dimension_numbers = #tpu.dot_dimension_numbers<[1], [0], [0], [1], [0, 0, 1, 1], [], []>} : vector<16x32xbf16>, vector<32x64xbf16>, vector<16x64xf32> -> vector<16x64xf32>
    %c0_4 = arith.constant 0 : index
    %c0_5 = arith.constant 0 : index
    %6 = vector.load %arg5[%c0_4, %c0_5] : memref<1x64xf32, #tpu.memory_space<vmem>>, vector<1x64xf32>
    %7 = vector.broadcast %6 : vector<1x64xf32> to vector<16x64xf32>
    %8 = arith.addf %5, %7 : vector<16x64xf32>
    %cst_6 = arith.constant 0.000000e+00 : f32
    %9 = vector.broadcast %cst_6 : f32 to vector<16x64xf32>
    %10 = arith.maximumf %8, %9 : vector<16x64xf32>
    %11 = arith.truncf %10 : vector<16x64xf32> to vector<16x64xbf16>
    %c0_7 = arith.constant 0 : index
    %c0_8 = arith.constant 0 : index
    %12 = vector.load %arg6[%c0_7, %c0_8] : memref<64x8xbf16, #tpu.memory_space<vmem>>, vector<64x8xbf16>
    %cst_9 = arith.constant dense<0.000000e+00> : vector<16x8xf32>
    %13 = tpu.matmul %11, %12, %cst_9 {dimension_numbers = #tpu.dot_dimension_numbers<[1], [0], [0], [1], [0, 0, 1, 1], [], []>} : vector<16x64xbf16>, vector<64x8xbf16>, vector<16x8xf32> -> vector<16x8xf32>
    %c0_10 = arith.constant 0 : index
    %c0_11 = arith.constant 0 : index
    %14 = vector.load %arg7[%c0_10, %c0_11] : memref<1x8xf32, #tpu.memory_space<vmem>>, vector<1x8xf32>
    %15 = vector.broadcast %14 : vector<1x8xf32> to vector<16x8xf32>
    %16 = arith.addf %13, %15 : vector<16x8xf32>
    %cst_12 = arith.constant dense<0xFF800000> : vector<16xf32>
    %17 = vector.multi_reduction <maximumf>, %16, %cst_12 [1] : vector<16x8xf32> to vector<16xf32>
    %18 = vector.shape_cast %17 : vector<16xf32> to vector<16x1xf32>
    %19 = vector.broadcast %18 : vector<16x1xf32> to vector<16x8xf32>
    %20 = arith.subf %16, %19 : vector<16x8xf32>
    %21 = math.exp %20 : vector<16x8xf32>
    %cst_13 = arith.constant dense<0.000000e+00> : vector<16xf32>
    %22 = vector.multi_reduction <add>, %21, %cst_13 [1] : vector<16x8xf32> to vector<16xf32>
    %23 = vector.shape_cast %22 : vector<16xf32> to vector<16x1xf32>
    %24 = math.log %23 : vector<16x1xf32>
    %c0_14 = arith.constant 0 : index
    %c0_15 = arith.constant 0 : index
    %25 = vector.load %arg3[%c0_14, %c0_15] : memref<16x1xi32, #tpu.memory_space<vmem>>, vector<16x1xi32>
    %26 = tpu.iota {dimensions = array<i32: 1>} : vector<16x8xi32>
    %27 = vector.broadcast %25 : vector<16x1xi32> to vector<16x8xi32>
    %28 = arith.cmpi eq, %26, %27 : vector<16x8xi32>
    %cst_16 = arith.constant 0.000000e+00 : f32
    %29 = vector.broadcast %cst_16 : f32 to vector<16x8xf32>
    %30 = arith.select %28, %20, %29 : vector<16x8xi1>, vector<16x8xf32>
    %cst_17 = arith.constant dense<0.000000e+00> : vector<16xf32>
    %31 = vector.multi_reduction <add>, %30, %cst_17 [1] : vector<16x8xf32> to vector<16xf32>
    %32 = vector.shape_cast %31 : vector<16xf32> to vector<16x1xf32>
    %c0_i32_18 = arith.constant 0 : i32
    %33 = vector.broadcast %c0_i32_18 : i32 to vector<16x1xi32>
    %34 = arith.cmpi sge, %25, %33 : vector<16x1xi32>
    %35 = arith.subf %24, %32 : vector<16x1xf32>
    %cst_19 = arith.constant 0.000000e+00 : f32
    %36 = vector.broadcast %cst_19 : f32 to vector<16x1xf32>
    %37 = arith.select %34, %35, %36 : vector<16x1xi1>, vector<16x1xf32>
    %c0_20 = arith.constant 0 : index
    %c0_21 = arith.constant 0 : index
    %c0_22 = arith.constant 0 : index
    %38 = vector.load %arg8[%c0_20, %c0_21, %c0_22] : memref<1x1x128xf32, #tpu.memory_space<vmem>>, vector<1x1x128xf32>
    %39 = vector.shape_cast %37 : vector<16x1xf32> to vector<1x16x1xf32>
    %cst_23 = arith.constant dense<0.000000e+00> : vector<1xf32>
    %40 = vector.multi_reduction <add>, %39, %cst_23 [1, 2] : vector<1x16x1xf32> to vector<1xf32>
    %41 = vector.shape_cast %40 : vector<1xf32> to vector<1x1x1xf32>
    %42 = vector.extract %41[0, 0, 0] : f32 from vector<1x1x1xf32>
    %43 = vector.broadcast %42 : f32 to vector<1x1x128xf32>
    %44 = arith.addf %38, %43 : vector<1x1x128xf32>
    %c0_24 = arith.constant 0 : index
    %c0_25 = arith.constant 0 : index
    %c0_26 = arith.constant 0 : index
    %45 = vector.load %arg8[%c0_24, %c0_25, %c0_26] : memref<1x1x128xf32, #tpu.memory_space<vmem>>, vector<1x1x128xf32>
    tpu.vector_store %arg8[%c0_24, %c0_25, %c0_26], %44 {strides = array<i32>} : memref<1x1x128xf32, #tpu.memory_space<vmem>>, vector<1x1x128xf32>,
    %c0_27 = arith.constant 0 : index
    %c0_28 = arith.constant 0 : index
    %c0_29 = arith.constant 0 : index
    %46 = vector.load %arg9[%c0_27, %c0_28, %c0_29] : memref<1x1x128xf32, #tpu.memory_space<vmem>>, vector<1x1x128xf32>
    %cst_30 = arith.constant 1.000000e+00 : f32
    %cst_31 = arith.constant 0.000000e+00 : f32
    %47 = vector.broadcast %cst_30 : f32 to vector<16x1xf32>
    %48 = vector.broadcast %cst_31 : f32 to vector<16x1xf32>
    %49 = arith.select %34, %47, %48 : vector<16x1xi1>, vector<16x1xf32>
    %50 = vector.shape_cast %49 : vector<16x1xf32> to vector<1x16x1xf32>
    %cst_32 = arith.constant dense<0.000000e+00> : vector<1xf32>
    %51 = vector.multi_reduction <add>, %50, %cst_32 [1, 2] : vector<1x16x1xf32> to vector<1xf32>
    %52 = vector.shape_cast %51 : vector<1xf32> to vector<1x1x1xf32>
    %53 = vector.extract %52[0, 0, 0] : f32 from vector<1x1x1xf32>
    %54 = vector.broadcast %53 : f32 to vector<1x1x128xf32>
    %55 = arith.addf %46, %54 : vector<1x1x128xf32>
    %c0_33 = arith.constant 0 : index
    %c0_34 = arith.constant 0 : index
    %c0_35 = arith.constant 0 : index
    %56 = vector.load %arg9[%c0_33, %c0_34, %c0_35] : memref<1x1x128xf32, #tpu.memory_space<vmem>>, vector<1x1x128xf32>
    tpu.vector_store %arg9[%c0_33, %c0_34, %c0_35], %55 {strides = array<i32>} : memref<1x1x128xf32, #tpu.memory_space<vmem>>, vector<1x1x128xf32>,
    return
  }
  func.func @transform_0(%arg0: i32, %arg1: i32) -> (i32, i32) {
    %c1_i32 = arith.constant 1 : i32
    %0 = arith.muli %arg0, %c1_i32 : i32
    %1 = arith.addi %0, %arg1 : i32
    %c0_i32 = arith.constant 0 : i32
    %c0_i32_0 = arith.constant 0 : i32
    return %1, %c0_i32 : i32, i32
  }
  func.func @transform_1(%arg0: i32, %arg1: i32) -> (i32, i32) {
    %c1_i32 = arith.constant 1 : i32
    %0 = arith.muli %arg0, %c1_i32 : i32
    %1 = arith.addi %0, %arg1 : i32
    %c0_i32 = arith.constant 0 : i32
    %c0_i32_0 = arith.constant 0 : i32
    return %1, %c0_i32 : i32, i32
  }
  func.func @transform_2(%arg0: i32, %arg1: i32) -> (i32, i32) {
    %c0_i32 = arith.constant 0 : i32
    %c0_i32_0 = arith.constant 0 : i32
    %c0_i32_1 = arith.constant 0 : i32
    return %c0_i32, %c0_i32_0 : i32, i32
  }
  func.func @transform_3(%arg0: i32, %arg1: i32) -> (i32, i32) {
    %c0_i32 = arith.constant 0 : i32
    %c0_i32_0 = arith.constant 0 : i32
    %c0_i32_1 = arith.constant 0 : i32
    return %c0_i32, %c0_i32_0 : i32, i32
  }
  func.func @transform_4(%arg0: i32, %arg1: i32) -> (i32, i32) {
    %c0_i32 = arith.constant 0 : i32
    %c0_i32_0 = arith.constant 0 : i32
    %c0_i32_1 = arith.constant 0 : i32
    return %c0_i32, %c0_i32_0 : i32, i32
  }
  func.func @transform_5(%arg0: i32, %arg1: i32) -> (i32, i32) {
    %c0_i32 = arith.constant 0 : i32
    %c0_i32_0 = arith.constant 0 : i32
    %c0_i32_1 = arith.constant 0 : i32
    return %c0_i32, %c0_i32_0 : i32, i32
  }
  func.func @transform_6(%arg0: i32, %arg1: i32) -> (i32, i32, i32) {
    %c0_i32 = arith.constant 0 : i32
    %c0_i32_0 = arith.constant 0 : i32
    %c0_i32_1 = arith.constant 0 : i32
    return %arg0, %c0_i32, %c0_i32_0 : i32, i32, i32
  }
  func.func @transform_7(%arg0: i32, %arg1: i32) -> (i32, i32, i32) {
    %c0_i32 = arith.constant 0 : i32
    %c0_i32_0 = arith.constant 0 : i32
    %c0_i32_1 = arith.constant 0 : i32
    return %arg0, %c0_i32, %c0_i32_0 : i32, i32, i32
  }
}

</mosaic_0001>

<llo_original>
// kernel: classifier_loss.1
$region0: #{classifier_loss.1}
  #allocation0 [shape = 'u32[]', space=smem, size = 0x4, offset = 0x4, fixed_abs, tag = 'smem constant byte address 0x4 - core index']
  #allocation1 [shape = 'u32[144,128]{1,0:T(1,128)}', space=vmem, size = 0x12000, scoped, tag = 'internal scratch']
  %s0 = inlined_call_operand.hbm [shape: bf16[32,32], index: 0, kind: input, shape index: {}]
  %s1 = inlined_call_operand.hbm [shape: s32[32,1], index: 1, kind: input, shape index: {}]
  %s2 = inlined_call_operand.hbm [shape: bf16[32,64], index: 2, kind: input, shape index: {}]
  %s3 = inlined_call_operand.hbm [shape: f32[1,64], index: 3, kind: input, shape index: {}]
  %s4 = inlined_call_operand.hbm [shape: bf16[64,8], index: 4, kind: input, shape index: {}]
  %s5 = inlined_call_operand.hbm [shape: f32[1,8], index: 5, kind: input, shape index: {}]
  %s6 = inlined_call_operand.hbm [shape: f32[2,1,128], index: 6, kind: output, shape index: {0}]
  %s7 = inlined_call_operand.hbm [shape: f32[2,1,128], index: 7, kind: output, shape index: {1}]
  %8 = xla_tuple %s6, %s7
  %s9 = sld [smem:[#allocation0]]
  $region93: #{classifier_loss.1} parent=0
    _
  %s11 = ssub.s32 1, %s9
  %s12 = scalar_select 0, %s11, %s9
  $region1: #{classifier_loss.1} parent=0
    #allocation2 [shape = 'u8[8192]{0}', space=vmem, size = 0x2000, scoped, tag = 'input window, operand 0']
    #allocation3 [shape = 's32[2]{0}', space=sflag, size = 0x8, scoped, tag = 'scoped memory for classifier_loss.1']
    #allocation4 [shape = 's32[2]{0}', space=sflag, size = 0x8, scoped, tag = 'scoped memory for classifier_loss.1']
    #allocation5 [shape = 'u8[16384]{0}', space=vmem, size = 0x4000, scoped, tag = 'input window, operand 1']
    #allocation6 [shape = 's32[2]{0}', space=sflag, size = 0x8, scoped, tag = 'scoped memory for classifier_loss.1']
    #allocation7 [shape = 'u8[8192]{0}', space=vmem, size = 0x2000, scoped, tag = 'input window, operand 2, single buffered']
    #allocation8 [shape = 'u8[512]{0}', space=vmem, size = 0x400, scoped, tag = 'input window, operand 3, single buffered']
    #allocation9 [shape = 's32[1]{0}', space=sflag, size = 0x4, scoped, tag = 'scoped memory for classifier_loss.1']
    #allocation10 [shape = 'u8[16384]{0}', space=vmem, size = 0x4000, scoped, tag = 'input window, operand 4, single buffered']
    #allocation11 [shape = 'u8[512]{0}', space=vmem, size = 0x400, scoped, tag = 'input window, operand 5, single buffered']
    #allocation12 [shape = 's32[1]{0}', space=sflag, size = 0x4, scoped, tag = 'scoped memory for classifier_loss.1']
    #allocation13 [shape = 'u8[1024]{0}', space=vmem, size = 0x400, scoped, tag = 'output window, operand 0']
    #allocation14 [shape = 'u8[1024]{0}', space=vmem, size = 0x400, scoped, tag = 'output window, operand 1']
    #allocation15 [shape = 's32[2]{0}', space=sflag, size = 0x8, scoped, tag = 'scoped memory for classifier_loss.1']
    %13 = vsyncpa [#allocation3], 0
    %s14 = scalar_lea.sflag [#allocation3], 1
    %15 = vsyncpa %s14, 0
    %16 = vsyncpa [#allocation6], 0
    %s17 = scalar_lea.sflag [#allocation6], 1
    %18 = vsyncpa %s17, 0
    %19 = vsyncpa [#allocation9], 0
    %20 = vsyncpa [#allocation12], 0
    %21 = vsyncpa [#allocation4], 0
    %s22 = scalar_lea.sflag [#allocation4], 1
    %23 = vsyncpa %s22, 0
    %24 = vsyncpa [#allocation15], 0
    %s25 = scalar_lea.sflag [#allocation15], 1
    %26 = vsyncpa %s25, 0
    loop: start=0, step=1, limit=4
    $region2: #{classifier_loss.1} parent=1 // loop_pre_header
      _
    $region3: #{classifier_loss.1} parent=1 // loop_header
      %s28 = sphi 0, %s32
      %p29 = scmp.ge.s32.totalorder %s28, 4
      %s35 = sphi 0, %s47
      %s36 = sphi 0, %s43
      %s37 = sphi 0, %s35
      %s38 = sphi 0, %s36
      %s39 = sphi 0, %s37
      %s40 = sphi 0, %s38
      %s52 = sphi 0, %s54
      %s55 = sphi 0, %s52
      %s56 = sphi 0, %s55
      %s72 = sphi 0, %s56
      %s80 = sphi 0, %s82
      %s83 = sphi 0, %s80
      %s84 = sphi 0, %s83
      %s100 = sphi 0, %s84
      %s104 = sphi 0, %s104
      %s106 = sphi 0, %s104
      %s107 = sphi 0, %s106
      %s121 = sphi 0, %s107
      %s125 = sphi 0, %s125
      %s127 = sphi 0, %s125
      %s128 = sphi 0, %s127
      %s142 = sphi 0, %s128
      %s146 = sphi 0, %s146
      %s148 = sphi 0, %s146
      %s149 = sphi 0, %s148
      %s163 = sphi 0, %s149
      %s167 = sphi 0, %s167
      %s169 = sphi 0, %s167
      %s170 = sphi 0, %s169
      %s184 = sphi 0, %s170
      %s190 = sphi 0, %s192
      %s193 = sphi 0, %s190
      %s194 = sphi 0, %s193
      %s210 = sphi 0, %s194
      %s216 = sphi 0, %s218
      %s219 = sphi 0, %s216
      %s220 = sphi 0, %s219
      %s236 = sphi 0, %s220
    $region4: #{classifier_loss.1} parent=1 // loop_header_branch
      %31 = sbr.rel (%p29) target = $region8
    $region5: #{classifier_loss.1} parent=1 // loop_body
      %s33 = ssub.s32 %s28, 1
      %s34 = ssub.s32 %s28, 2
      %s41 = sadd.s32 1, %s36
      %p42 = scmp.ge.s32.totalorder %s41, 1
      %s43 = scalar_select %p42, 0, %s41
      %s44 = sadd.s32 1, %s35
      %s45 = scalar_select %p42, %s44, %s35
      %p46 = scmp.ge.s32.totalorder %s45, 2
      %s47 = scalar_select %p46, 0, %s45
      %s48 = sadd.s32 %s35, %s36
      %s49 = sadd.s32 %s47, %s43
      %s50 = ssub.s32 %s48, %s49
      %p51 = scmp.eq.s32.totalorder %s50, 0
      %s53 = sadd.s32 %s52, 1
      %s54 = scalar_select %p51, %s52, %s53
      %p57 = pneg %p51
      %p58 = scmp.eq.s32.totalorder %s28, 1
      %p59 = por %p57, %p58
      %p60 = scmp.ne.s32.totalorder %s52, %s55
      %p61 = scmp.eq.s32.totalorder %s28, 0
      %p62 = por %p60, %p61
      %p63 = scmp.ne.s32.totalorder %s52, %s55
      %p64 = scmp.eq.s32.totalorder %s33, 1
      %p65 = por %p63, %p64
      %p66 = scmp.ne.s32.totalorder %s55, %s56
      %p67 = scmp.eq.s32.totalorder %s33, 0
      %p68 = por %p66, %p67
      %p69 = scmp.ne.s32.totalorder %s55, %s56
      %p70 = scmp.eq.s32.totalorder %s34, 1
      %p71 = por %p69, %p70
      %p73 = scmp.ne.s32.totalorder %s56, %s72
      %p74 = scmp.eq.s32.totalorder %s34, 0
      %p75 = por %p73, %p74
      %s76 = sadd.s32 %s35, %s36
      %s77 = sadd.s32 %s47, %s43
      %s78 = ssub.s32 %s76, %s77
      %p79 = scmp.eq.s32.totalorder %s78, 0
      %s81 = sadd.s32 %s80, 1
      %s82 = scalar_select %p79, %s80, %s81
      %p85 = pneg %p79
      %p86 = scmp.eq.s32.totalorder %s28, 1
      %p87 = por %p85, %p86
      %p88 = scmp.ne.s32.totalorder %s80, %s83
      %p89 = scmp.eq.s32.totalorder %s28, 0
      %p90 = por %p88, %p89
      %p91 = scmp.ne.s32.totalorder %s80, %s83
      %p92 = scmp.eq.s32.totalorder %s33, 1
      %p93 = por %p91, %p92
      %p94 = scmp.ne.s32.totalorder %s83, %s84
      %p95 = scmp.eq.s32.totalorder %s33, 0
      %p96 = por %p94, %p95
      %p97 = scmp.ne.s32.totalorder %s83, %s84
      %p98 = scmp.eq.s32.totalorder %s34, 1
      %p99 = por %p97, %p98
      %p101 = scmp.ne.s32.totalorder %s84, %s100
      %p102 = scmp.eq.s32.totalorder %s34, 0
      %p103 = por %p101, %p102
      %s105 = sadd.s32 %s104, 1
      %p108 = scmp.eq.s32.totalorder %s28, 1
      %p109 = scmp.ne.s32.totalorder %s104, %s106
      %p110 = scmp.eq.s32.totalorder %s28, 0
      %p111 = por %p109, %p110
      %p112 = scmp.ne.s32.totalorder %s104, %s106
      %p113 = scmp.eq.s32.totalorder %s33, 1
      %p114 = por %p112, %p113
      %p115 = scmp.ne.s32.totalorder %s106, %s107
      %p116 = scmp.eq.s32.totalorder %s33, 0
      %p117 = por %p115, %p116
      %p118 = scmp.ne.s32.totalorder %s106, %s107
      %p119 = scmp.eq.s32.totalorder %s34, 1
      %p120 = por %p118, %p119
      %p122 = scmp.ne.s32.totalorder %s107, %s121
      %p123 = scmp.eq.s32.totalorder %s34, 0
      %p124 = por %p122, %p123
      %s126 = sadd.s32 %s125, 1
      %p129 = scmp.eq.s32.totalorder %s28, 1
      %p130 = scmp.ne.s32.totalorder %s125, %s127
      %p131 = scmp.eq.s32.totalorder %s28, 0
      %p132 = por %p130, %p131
      %p133 = scmp.ne.s32.totalorder %s125, %s127
      %p134 = scmp.eq.s32.totalorder %s33, 1
      %p135 = por %p133, %p134
      %p136 = scmp.ne.s32.totalorder %s127, %s128
      %p137 = scmp.eq.s32.totalorder %s33, 0
      %p138 = por %p136, %p137
      %p139 = scmp.ne.s32.totalorder %s127, %s128
      %p140 = scmp.eq.s32.totalorder %s34, 1
      %p141 = por %p139, %p140
      %p143 = scmp.ne.s32.totalorder %s128, %s142
      %p144 = scmp.eq.s32.totalorder %s34, 0
      %p145 = por %p143, %p144
      %s147 = sadd.s32 %s146, 1
      %p150 = scmp.eq.s32.totalorder %s28, 1
      %p151 = scmp.ne.s32.totalorder %s146, %s148
      %p152 = scmp.eq.s32.totalorder %s28, 0
      %p153 = por %p151, %p152
      %p154 = scmp.ne.s32.totalorder %s146, %s148
      %p155 = scmp.eq.s32.totalorder %s33, 1
      %p156 = por %p154, %p155
      %p157 = scmp.ne.s32.totalorder %s148, %s149
      %p158 = scmp.eq.s32.totalorder %s33, 0
      %p159 = por %p157, %p158
      %p160 = scmp.ne.s32.totalorder %s148, %s149
      %p161 = scmp.eq.s32.totalorder %s34, 1
      %p162 = por %p160, %p161
      %p164 = scmp.ne.s32.totalorder %s149, %s163
      %p165 = scmp.eq.s32.totalorder %s34, 0
      %p166 = por %p164, %p165
      %s168 = sadd.s32 %s167, 1
      %p171 = scmp.eq.s32.totalorder %s28, 1
      %p172 = scmp.ne.s32.totalorder %s167, %s169
      %p173 = scmp.eq.s32.totalorder %s28, 0
      %p174 = por %p172, %p173
      %p175 = scmp.ne.s32.totalorder %s167, %s169
      %p176 = scmp.eq.s32.totalorder %s33, 1
      %p177 = por %p175, %p176
      %p178 = scmp.ne.s32.totalorder %s169, %s170
      %p179 = scmp.eq.s32.totalorder %s33, 0
      %p180 = por %p178, %p179
      %p181 = scmp.ne.s32.totalorder %s169, %s170
      %p182 = scmp.eq.s32.totalorder %s34, 1
      %p183 = por %p181, %p182
      %p185 = scmp.ne.s32.totalorder %s170, %s184
      %p186 = scmp.eq.s32.totalorder %s34, 0
      %p187 = por %p185, %p186
      %s188 = ssub.s32 %s35, %s47
      %p189 = scmp.eq.s32.totalorder %s188, 0
      %s191 = sadd.s32 %s190, 1
      %s192 = scalar_select %p189, %s190, %s191
      %p195 = pneg %p189
      %p196 = scmp.eq.s32.totalorder %s28, 1
      %p197 = por %p195, %p196
      %p198 = scmp.ne.s32.totalorder %s190, %s193
      %p199 = scmp.eq.s32.totalorder %s28, 0
      %p200 = por %p198, %p199
      %p201 = scmp.ne.s32.totalorder %s190, %s193
      %p202 = scmp.eq.s32.totalorder %s33, 1
      %p203 = por %p201, %p202
      %p204 = scmp.ne.s32.totalorder %s193, %s194
      %p205 = scmp.eq.s32.totalorder %s33, 0
      %p206 = por %p204, %p205
      %p207 = scmp.ne.s32.totalorder %s193, %s194
      %p208 = scmp.eq.s32.totalorder %s34, 1
      %p209 = por %p207, %p208
      %p211 = scmp.ne.s32.totalorder %s194, %s210
      %p212 = scmp.eq.s32.totalorder %s34, 0
      %p213 = por %p211, %p212
      %s214 = ssub.s32 %s35, %s47
      %p215 = scmp.eq.s32.totalorder %s214, 0
      %s217 = sadd.s32 %s216, 1
      %s218 = scalar_select %p215, %s216, %s217
      %p221 = pneg %p215
      %p222 = scmp.eq.s32.totalorder %s28, 1
      %p223 = por %p221, %p222
      %p224 = scmp.ne.s32.totalorder %s216, %s219
      %p225 = scmp.eq.s32.totalorder %s28, 0
      %p226 = por %p224, %p225
      %p227 = scmp.ne.s32.totalorder %s216, %s219
      %p228 = scmp.eq.s32.totalorder %s33, 1
      %p229 = por %p227, %p228
      %p230 = scmp.ne.s32.totalorder %s219, %s220
      %p231 = scmp.eq.s32.totalorder %s33, 0
      %p232 = por %p230, %p231
      %p233 = scmp.ne.s32.totalorder %s219, %s220
      %p234 = scmp.eq.s32.totalorder %s34, 1
      %p235 = por %p233, %p234
      %p237 = scmp.ne.s32.totalorder %s220, %s236
      %p238 = scmp.eq.s32.totalorder %s34, 0
      %p239 = por %p237, %p238
      %p240 = scmp.le.s32.totalorder 1, %s28
      %p241 = scmp.lt.s32.totalorder %s28, 3
      %p242 = pnand %p240, %p241
      %p243 = pneg %p242
      // Predicated region
      $region9: #{classifier_loss.1} parent=5 // pred_check
        _
      $region10: #{classifier_loss.1} parent=5 // pred_check_branch
        %245 = sbr.rel (%p242) target = $region12
      $region11: #{classifier_loss.1} parent=5 // pred_region
        %s246 = ssub.s32 %s28, 1
        // Predicated region
        $region13: #{classifier_loss.1} parent=11 // pred_check
          %p247 = pneg %p117
        $region14: #{classifier_loss.1} parent=11 // pred_check_branch
          %249 = sbr.rel (%p247) target = $region16
        $region15: #{classifier_loss.1} parent=11 // pred_region
          %s251 = ssub.s32 256, 256
          %252 = vsyncadd [#allocation6], %s251
          %s253 = sshll.u32 [#allocation7], 4
          %s254 = int_to_ptr.vmem [resolvable:$true] %s253
          %259 = dma.hbm_to_vmem [thread:$0]  %s2, 256, %s254, [#allocation6], 64, 64, 4
        $region16: #{classifier_loss.1} parent=11 // pred_fallthru
          _
        // Predicated region
        $region17: #{classifier_loss.1} parent=11 // pred_check
          %p260 = pneg %p138
        $region18: #{classifier_loss.1} parent=11 // pred_check_branch
          %262 = sbr.rel (%p260) target = $region20
        $region19: #{classifier_loss.1} parent=11 // pred_region
          %s264 = ssub.s32 16, 16
          %265 = vsyncadd [#allocation9], %s264
          %s267 = sshll.u32 [#allocation8], 4
          %s268 = int_to_ptr.vmem [resolvable:$true] %s267
          %270 = dma.hbm_to_vmem [thread:$0]  %s3, 16, %s268, [#allocation9]
        $region20: #{classifier_loss.1} parent=11 // pred_fallthru
          _
        // Predicated region
        $region21: #{classifier_loss.1} parent=11 // pred_check
          %p271 = pneg %p159
        $region22: #{classifier_loss.1} parent=11 // pred_check_branch
          %273 = sbr.rel (%p271) target = $region24
        $region23: #{classifier_loss.1} parent=11 // pred_region
          %s275 = ssub.s32 512, 512
          %276 = vsyncadd [#allocation9], %s275
          %s277 = sshll.u32 [#allocation10], 4
          %s278 = int_to_ptr.vmem [resolvable:$true] %s277
          %283 = dma.hbm_to_vmem [thread:$0]  %s4, 512, %s278, [#allocation9], 64, 64, 4
        $region24: #{classifier_loss.1} parent=11 // pred_fallthru
          _
        // Predicated region
        $region25: #{classifier_loss.1} parent=11 // pred_check
          %p284 = pneg %p180
        $region26: #{classifier_loss.1} parent=11 // pred_check_branch
          %286 = sbr.rel (%p284) target = $region28
        $region27: #{classifier_loss.1} parent=11 // pred_region
          %s288 = ssub.s32 16, 16
          %289 = vsyncadd [#allocation12], %s288
          %s291 = sshll.u32 [#allocation11], 4
          %s292 = int_to_ptr.vmem [resolvable:$true] %s291
          %294 = dma.hbm_to_vmem [thread:$0]  %s5, 16, %s292, [#allocation12]
        $region28: #{classifier_loss.1} parent=11 // pred_fallthru
          _
      $region12: #{classifier_loss.1} parent=5 // pred_fallthru
        _
      %p295 = scmp.lt.s32.totalorder %s28, 2
      // Predicated region
      $region29: #{classifier_loss.1} parent=5 // pred_check
        %p296 = pneg %p295
      $region30: #{classifier_loss.1} parent=5 // pred_check_branch
        %298 = sbr.rel (%p296) target = $region32
      $region31: #{classifier_loss.1} parent=5 // pred_region
        // Predicated region
        $region33: #{classifier_loss.1} parent=31 // pred_check
          %p299 = pneg %p62
        $region34: #{classifier_loss.1} parent=31 // pred_check_branch
          %301 = sbr.rel (%p299) target = $region36
        $region35: #{classifier_loss.1} parent=31 // pred_region
          %s302 = sand.u32 %s52, 1
          %s303 = scalar_lea.sflag [#allocation3], %s302
          %s304 = sand.u32 %s52, 1
          %s305 = smul.addr %s304, 8
          %s306 = scalar_lea.vmem [#allocation2], %s305
          %s307 = sadd.s32 %s35, %s36
          %s308 = smul.u32 2, %s307
          %s310 = ssub.s32 128, 128
          %311 = vsyncadd %s303, %s310
          %s312 = smul.addr %s308, 64
          %s313 = scalar_lea.hbm %s0, %s312
          %s314 = sshll.u32 %s306, 4
          %s315 = int_to_ptr.vmem [resolvable:$true] %s314
          %320 = dma.hbm_to_vmem [thread:$0]  %s313, 128, %s315, %s303, 64, 64, 4
        $region36: #{classifier_loss.1} parent=31 // pred_fallthru
          _
        // Predicated region
        $region37: #{classifier_loss.1} parent=31 // pred_check
          %p321 = pneg %p90
        $region38: #{classifier_loss.1} parent=31 // pred_check_branch
          %323 = sbr.rel (%p321) target = $region40
        $region39: #{classifier_loss.1} parent=31 // pred_region
          %s324 = sand.u32 %s28, 1
          %s325 = scalar_lea.sflag [#allocation6], %s324
          %s326 = sand.u32 %s80, 1
          %s327 = smul.addr %s326, 16
          %s328 = scalar_lea.vmem [#allocation5], %s327
          %s329 = sadd.s32 %s35, %s36
          %s330 = smul.u32 2, %s329
          %s332 = ssub.s32 256, 256
          %333 = vsyncadd %s325, %s332
          %s334 = smul.addr %s330, 128
          %s335 = scalar_lea.hbm %s1, %s334
          %s336 = sshll.u32 %s328, 4
          %s337 = int_to_ptr.vmem [resolvable:$true] %s336
          %342 = dma.hbm_to_vmem [thread:$0]  %s335, 256, %s337, %s325, 128, 128, 8
        $region40: #{classifier_loss.1} parent=31 // pred_fallthru
          _
      $region32: #{classifier_loss.1} parent=5 // pred_fallthru
        _
      %p343 = scmp.le.s32.totalorder 1, %s28
      %p344 = scmp.lt.s32.totalorder %s28, 3
      %p345 = pnand %p343, %p344
      %p346 = pneg %p345
      // Predicated region
      $region41: #{classifier_loss.1} parent=5 // pred_check
        _
      $region42: #{classifier_loss.1} parent=5 // pred_check_branch
        %348 = sbr.rel (%p345) target = $region44
      $region43: #{classifier_loss.1} parent=5 // pred_region
        %s349 = ssub.s32 %s28, 1
        %s350 = sand.u32 %s55, 1
        %s351 = scalar_lea.sflag [#allocation3], %s350
        %s352 = sand.u32 %s55, 1
        %s353 = smul.addr %s352, 8
        %s354 = scalar_lea.vmem [#allocation2], %s353
        // Predicated region
        $region45: #{classifier_loss.1} parent=43 // pred_check
          %p355 = pneg %p68
        $region46: #{classifier_loss.1} parent=43 // pred_check_branch
          %357 = sbr.rel (%p355) target = $region48
        $region47: #{classifier_loss.1} parent=43 // pred_region
          %358 = dma.done %s351, 128
        $region48: #{classifier_loss.1} parent=43 // pred_fallthru
          _
        %s359 = sand.u32 %s33, 1
        %s360 = scalar_lea.sflag [#allocation6], %s359
        %s361 = sand.u32 %s83, 1
        %s362 = smul.addr %s361, 16
        %s363 = scalar_lea.vmem [#allocation5], %s362
        // Predicated region
        $region49: #{classifier_loss.1} parent=43 // pred_check
          %p364 = pneg %p96
        $region50: #{classifier_loss.1} parent=43 // pred_check_branch
          %366 = sbr.rel (%p364) target = $region52
        $region51: #{classifier_loss.1} parent=43 // pred_region
          %367 = dma.done %s360, 256
        $region52: #{classifier_loss.1} parent=43 // pred_fallthru
          _
        // Predicated region
        $region53: #{classifier_loss.1} parent=43 // pred_check
          %p368 = pneg %p117
        $region54: #{classifier_loss.1} parent=43 // pred_check_branch
          %370 = sbr.rel (%p368) target = $region56
        $region55: #{classifier_loss.1} parent=43 // pred_region
          %371 = dma.done [#allocation6], 256
        $region56: #{classifier_loss.1} parent=43 // pred_fallthru
          _
        // Predicated region
        $region57: #{classifier_loss.1} parent=43 // pred_check
          %p372 = pneg %p138
        $region58: #{classifier_loss.1} parent=43 // pred_check_branch
          %374 = sbr.rel (%p372) target = $region60
        $region59: #{classifier_loss.1} parent=43 // pred_region
          %375 = dma.done [#allocation9], 16
        $region60: #{classifier_loss.1} parent=43 // pred_fallthru
          _
        // Predicated region
        $region61: #{classifier_loss.1} parent=43 // pred_check
          %p376 = pneg %p159
        $region62: #{classifier_loss.1} parent=43 // pred_check_branch
          %378 = sbr.rel (%p376) target = $region64
        $region63: #{classifier_loss.1} parent=43 // pred_region
          %379 = dma.done [#allocation9], 512
        $region64: #{classifier_loss.1} parent=43 // pred_fallthru
          _
        // Predicated region
        $region65: #{classifier_loss.1} parent=43 // pred_check
          %p380 = pneg %p180
        $region66: #{classifier_loss.1} parent=43 // pred_check_branch
          %382 = sbr.rel (%p380) target = $region68
        $region67: #{classifier_loss.1} parent=43 // pred_region
          %383 = dma.done [#allocation12], 16
        $region68: #{classifier_loss.1} parent=43 // pred_fallthru
          _
        %s384 = sand.u32 %s55, 1
        %s385 = scalar_lea.sflag [#allocation3], %s384
        %s386 = sand.u32 %s55, 1
        %s387 = smul.addr %s386, 8
        %s388 = scalar_lea.vmem [#allocation2], %s387
        %p389 = pneg %p68
        %p390 = pneg %p65
        %s391 = sand.u32 %s33, 1
        %s392 = scalar_lea.sflag [#allocation6], %s391
        %s393 = sand.u32 %s83, 1
        %s394 = smul.addr %s393, 16
        %s395 = scalar_lea.vmem [#allocation5], %s394
        %p396 = pneg %p96
        %p397 = pneg %p93
        %p398 = pneg %p117
        %p399 = pneg %p114
        %p400 = pneg %p138
        %p401 = pneg %p135
        %p402 = pneg %p159
        %p403 = pneg %p156
        %p404 = pneg %p180
        %p405 = pneg %p177
        %p406 = pneg %p206
        %p407 = pneg %p203
        %s408 = sand.u32 %s193, 1
        %s409 = scalar_lea.sflag [#allocation4], %s408
        %s410 = sand.u32 %s193, 1
        %s411 = scalar_lea.vmem [#allocation13], %s410
        %p412 = pneg %p232
        %p413 = pneg %p229
        %s414 = sand.u32 %s219, 1
        %s415 = scalar_lea.sflag [#allocation15], %s414
        %s416 = sand.u32 %s219, 1
        %s417 = scalar_lea.vmem [#allocation14], %s416
        %s418 = sadd.s32 %s37, %s38
        %s419 = smul.u32 2, %s418
        %s420 = sadd.s32 %s37, %s38
        %s421 = smul.u32 2, %s420
        %p423 = scmp.eq.s32.totalorder %s38, 0
        // Predicated region
        $region69: #{classifier_loss.1} parent=43 // pred_check
          %p424 = pneg %p423
        $region70: #{classifier_loss.1} parent=43 // pred_check_branch
          %426 = sbr.rel (%p424) target = $region72
        $region71: #{classifier_loss.1} parent=43 // pred_region
          %427 = vst [vmem:[%s411] sm:$0x1] 0.0
          %428 = vst [vmem:[%s417] sm:$0x1] 0.0
        $region72: #{classifier_loss.1} parent=43 // pred_fallthru
          _
        %v429 = vld [vmem:[%s354] sm:$0xf]
        %v430 = vld [vmem:[%s354 + $0x4] sm:$0xf]
        %v431 = vld [vmem:[#allocation7] sm:$0xf]
        %v432 = vld [vmem:[#allocation7 + $0x4] sm:$0xf]
        %v433 = vld [vmem:[#allocation7 + $0x8] sm:$0xf]
        %v434 = vld [vmem:[#allocation7 + $0xc] sm:$0xf]
        %v435 = vld [vmem:[#allocation8] sm:$0x1]
        %v437 = vlaneseq
        %v438 = vshrl.u32 %v437, 7
        %v439 = vsub.s32 0, %v438
        %v440 = vrot.slane %v435, %v439
        %v444 = vunpack.c.l.b16 %v429
        %v445 = vunpack.c.l.b16 %v430
        %v446 = vpack.c.b16 %v445, %v444
        %v451 = vunpack.c.l.b16 %v431
        %v452 = vunpack.c.l.b16 %v432
        %v453 = vunpack.c.l.b16 %v433
        %v454 = vunpack.c.l.b16 %v434
        %v455 = vpack.c.b16 %v452, %v451
        %v456 = vpack.c.b16 %v454, %v453
        %vm459 = vcmask 261120
        %v461 = vsel %vm459, %v446, 0
        %463 = vmatprep.subr.bf16.mxu0 0
        %464 = vmatpush1.bf16.msra.mxu0 %v455
        %465 = vmatprep.subr.bf16.mxu0 0
        %466 = vmatpush1.bf16.msra.mxu0 %v456
        %467 = vmatprep.subr.bf16.mxu0 0
        %468 = vmatpush1.bf16.msra.mxu0 0
        %469 = vmatprep.subr.bf16.mxu0 0
        %470 = vmatpush1.bf16.msra.mxu0 0
        %471 = vmatprep.subr.bf16.mxu0 0
        %472 = vmatpush1.bf16.msra.mxu0 0
        %473 = vmatprep.subr.bf16.mxu0 0
        %474 = vmatpush1.bf16.msra.mxu0 0
        %475 = vmatprep.subr.bf16.mxu0 0
        %476 = vmatpush1.bf16.msra.mxu0 0
        %477 = vmatprep.subr.bf16.mxu0 0
        %478 = vmatpush1.bf16.msra.mxu0 0
        %479 = vmatprep.subr.bf16.mxu0 0
        %480 = vmatpush1.bf16.msra.mxu0 0
        %481 = vmatprep.subr.bf16.mxu0 0
        %482 = vmatpush1.bf16.msra.mxu0 0
        %483 = vmatprep.subr.bf16.mxu0 0
        %484 = vmatpush1.bf16.msra.mxu0 0
        %485 = vmatprep.subr.bf16.mxu0 0
        %486 = vmatpush1.bf16.msra.mxu0 0
        %487 = vmatprep.subr.bf16.mxu0 0
        %488 = vmatpush1.bf16.msra.mxu0 0
        %489 = vmatprep.subr.bf16.mxu0 0
        %490 = vmatpush1.bf16.msra.mxu0 0
        %491 = vmatprep.subr.bf16.mxu0 0
        %492 = vmatpush1.bf16.msra.mxu0 0
        %493 = vmatprep.subr.bf16.mxu0 0
        %494 = vmatpush1.bf16.msra.mxu0 0
        %495 = vmatprep.mubr.bf16.mxu0 0
        %496 = vmatmul.mubr.bf16.gmra.mrb[0].mxu0 %v461
        %v497 = vpop.f32.mrb[0].mxu0
        %v498 = vadd.f32 %v440, %v497
        %v499 = vpop.f32.mrb[0].mxu0
        %v500 = vpop.f32.mrb[0].mxu0
        %v501 = vadd.f32 %v440, %v500
        %v502 = vpop.f32.mrb[0].mxu0
        %503 = vdwg.mxu0
        %v504 = vmax.f32 %v498, 0.0
        %v505 = vmax.f32 %v501, 0.0
        %v506 = vpack.c.bf16 %v505, %v504
        %v507 = vld [vmem:[#allocation10] sm:$0xf]
        %v508 = vld [vmem:[#allocation10 + $0x4] sm:$0xf]
        %v509 = vld [vmem:[#allocation10 + $0x8] sm:$0xf]
        %v510 = vld [vmem:[#allocation10 + $0xc] sm:$0xf]
        %v511 = vld [vmem:[#allocation10 + $0x10] sm:$0xf]
        %v512 = vld [vmem:[#allocation10 + $0x14] sm:$0xf]
        %v513 = vld [vmem:[#allocation10 + $0x18] sm:$0xf]
        %v514 = vld [vmem:[#allocation10 + $0x1c] sm:$0xf]
        %v515 = vld [vmem:[#allocation11] sm:$0x1]
        %v517 = vlaneseq
        %v518 = vshrl.u32 %v517, 7
        %v519 = vsub.s32 0, %v518
        %v520 = vrot.slane %v515, %v519
        %v530 = vunpack.c.l.b16 %v507
        %v531 = vunpack.c.l.b16 %v508
        %v532 = vunpack.c.l.b16 %v509
        %v533 = vunpack.c.l.b16 %v510
        %v534 = vunpack.c.l.b16 %v511
        %v535 = vunpack.c.l.b16 %v512
        %v536 = vunpack.c.l.b16 %v513
        %v537 = vunpack.c.l.b16 %v514
        %v538 = vpack.c.b16 %v531, %v530
        %v539 = vpack.c.b16 %v533, %v532
        %v540 = vpack.c.b16 %v535, %v534
        %v541 = vpack.c.b16 %v537, %v536
        %vm546 = vcmask 523264
        %v548 = vsel %vm546, %v506, 0
        %550 = vmatprep.subr.bf16.mxu0 0
        %551 = vmatpush1.bf16.msra.mxu0 %v538
        %552 = vmatprep.subr.bf16.mxu0 0
        %553 = vmatpush1.bf16.msra.mxu0 %v539
        %554 = vmatprep.subr.bf16.mxu0 0
        %555 = vmatpush1.bf16.msra.mxu0 %v540
        %556 = vmatprep.subr.bf16.mxu0 0
        %557 = vmatpush1.bf16.msra.mxu0 %v541
        %558 = vmatprep.subr.bf16.mxu0 0
        %559 = vmatpush1.bf16.msra.mxu0 0
        %560 = vmatprep.subr.bf16.mxu0 0
        %561 = vmatpush1.bf16.msra.mxu0 0
        %562 = vmatprep.subr.bf16.mxu0 0
        %563 = vmatpush1.bf16.msra.mxu0 0
        %564 = vmatprep.subr.bf16.mxu0 0
        %565 = vmatpush1.bf16.msra.mxu0 0
        %566 = vmatprep.subr.bf16.mxu0 0
        %567 = vmatpush1.bf16.msra.mxu0 0
        %568 = vmatprep.subr.bf16.mxu0 0
        %569 = vmatpush1.bf16.msra.mxu0 0
        %570 = vmatprep.subr.bf16.mxu0 0
        %571 = vmatpush1.bf16.msra.mxu0 0
        %572 = vmatprep.subr.bf16.mxu0 0
        %573 = vmatpush1.bf16.msra.mxu0 0
        %574 = vmatprep.subr.bf16.mxu0 0
        %575 = vmatpush1.bf16.msra.mxu0 0
        %576 = vmatprep.subr.bf16.mxu0 0
        %577 = vmatpush1.bf16.msra.mxu0 0
        %578 = vmatprep.subr.bf16.mxu0 0
        %579 = vmatpush1.bf16.msra.mxu0 0
        %580 = vmatprep.subr.bf16.mxu0 0
        %581 = vmatpush1.bf16.msra.mxu0 0
        %582 = vmatprep.mubr.bf16.mxu0 0
        %583 = vmatmul.mubr.bf16.gmra.mrb[0].mxu0 %v548
        %v584 = vpop.f32.mrb[0].mxu0
        %v585 = vadd.f32 %v520, %v584
        %v586 = vpop.f32.mrb[0].mxu0
        %v587 = vpop.f32.mrb[0].mxu0
        %v588 = vadd.f32 %v520, %v587
        %v589 = vpop.f32.mrb[0].mxu0
        %590 = vdwg.mxu0
        %vm591 = vcmask 64512
        %v592 = vsel %vm591, %v585, -inf
        %593 = vmax.xlane.f32.xlu0 %v592
        %v594 = vpop.xlane.xlu0 %593
        %v595 = vsel %vm591, %v588, -inf
        %596 = vmax.xlane.f32.xlu0 %v595
        %v597 = vpop.xlane.xlu0 %596
        %v598 = vsub.f32 %v585, %v594
        %v599 = vsub.f32 %v588, %v597
        %v600 = vmul.f32 %v598, 1.442695
        %v601 = vpow.pop %v600
        %v602 = vmul.f32 %v599, 1.442695
        %v603 = vpow.pop %v602
        %v604 = vsel %vm591, %v601, 0.0
        %605 = vadd.xlane.f32.xlu0 %v604
        %v606 = vpop.xlane.xlu0 %605
        %v607 = vsel %vm591, %v603, 0.0
        %608 = vadd.xlane.f32.xlu0 %v607
        %v609 = vpop.xlane.xlu0 %608
        %v610 = vlog2.pop %v606
        %v611 = vmul.f32 %v610, 0.6931472
        %v612 = vlog2.pop %v609
        %v613 = vmul.f32 %v612, 0.6931472
        %v614 = vld [vmem:[%s363] sm:$0xff]
        %v615 = vld [vmem:[%s363 + $0x8] sm:$0xff]
        %v616 = vlaneseq
        %v617 = vand.u32 %v616, 127
        %618 = vset.pattern.permute.xlu0 0
        %619 = vperm.xlu0 %618, %v614
        %v620 = vpop.permute.xlu0 %619
        %621 = vset.pattern.permute.xlu0 0
        %622 = vperm.xlu0 %621, %v615
        %v623 = vpop.permute.xlu0 %622
        %vm624 = vcmp.eq.s32.totalorder %v617, %v620
        %vm625 = vcmp.eq.s32.totalorder %v617, %v623
        %v626 = vsel %vm624, %v598, 0.0
        %v627 = vsel %vm625, %v599, 0.0
        %v628 = vsel %vm591, %v626, 0.0
        %629 = vadd.xlane.f32.xlu0 %v628
        %v630 = vpop.xlane.xlu0 %629
        %v631 = vsel %vm591, %v627, 0.0
        %632 = vadd.xlane.f32.xlu0 %v631
        %v633 = vpop.xlane.xlu0 %632
        %vm634 = vcmp.ge.s32.totalorder %v614, 0
        %vm635 = vcmp.ge.s32.totalorder %v615, 0
        %v636 = vsub.f32 %v611, %v630
        %v637 = vsub.f32 %v613, %v633
        %v638 = vsel %vm634, %v636, 0.0
        %v639 = vsel %vm635, %v637, 0.0
        %v640 = vld [vmem:[%s411] sm:$0x1]
        %vm641 = vcmask 7168
        %v642 = vsel %vm641, %v638, 0.0
        %v643 = vsel %vm641, %v639, 0.0
        %v644 = vadd.f32 %v642, %v643
        %645 = vadd.xlane.f32.xlu0 %v644
        %v646 = vpop.xlane.xlu0 %645
        %v647 = vrot.slane %v646, 4
        %v648 = vadd.f32 %v646, %v647
        %v649 = vrot.slane %v648, 2
        %v650 = vadd.f32 %v648, %v649
        %v651 = vrot.slane %v650, 1
        %v652 = vadd.f32 %v650, %v651
        %s653 = vtos %v652
        %v654 = vstv %s653
        %v655 = vadd.f32 %v640, %v654
        %656 = vst [vmem:[%s411] sm:$0x1] %v655
        %v657 = vld [vmem:[%s417] sm:$0x1]
        %v658 = vsel %vm634, 1.0, 0.0
        %v659 = vsel %vm635, 1.0, 0.0
        %v660 = vsel %vm641, %v658, 0.0
        %v661 = vsel %vm641, %v659, 0.0
        %v662 = vadd.f32 %v660, %v661
        %663 = vadd.xlane.f32.xlu0 %v662
        %v664 = vpop.xlane.xlu0 %663
        %v665 = vrot.slane %v664, 4
        %v666 = vadd.f32 %v664, %v665
        %v667 = vrot.slane %v666, 2
        %v668 = vadd.f32 %v666, %v667
        %v669 = vrot.slane %v668, 1
        %v670 = vadd.f32 %v668, %v669
        %s671 = vtos %v670
        %v672 = vstv %s671
        %v673 = vadd.f32 %v657, %v672
        %674 = vst [vmem:[%s417] sm:$0x1] %v673
        %s675 = sand.u32 %s193, 1
        %s676 = scalar_lea.sflag [#allocation4], %s675
        %s677 = sand.u32 %s193, 1
        %s678 = scalar_lea.vmem [#allocation13], %s677
        %s679 = sand.u32 %s219, 1
        %s680 = scalar_lea.sflag [#allocation15], %s679
        %s681 = sand.u32 %s219, 1
        %s682 = scalar_lea.vmem [#allocation14], %s681
        // Predicated region
        $region73: #{classifier_loss.1} parent=43 // pred_check
          %p683 = pneg %p203
        $region74: #{classifier_loss.1} parent=43 // pred_check_branch
          %685 = sbr.rel (%p683) target = $region76
        $region75: #{classifier_loss.1} parent=43 // pred_region
          %s687 = ssub.s32 16, 16
          %688 = vsyncadd %s676, %s687
          %s689 = smul.addr %s37, 16
          %s690 = scalar_lea.hbm %s6, %s689
          %s692 = sshll.u32 %s678, 4
          %s693 = int_to_ptr.vmem [resolvable:$true] %s692
          %695 = dma.vmem_to_hbm [thread:$0]  %s693, 16, %s690, %s676
        $region76: #{classifier_loss.1} parent=43 // pred_fallthru
          _
        // Predicated region
        $region77: #{classifier_loss.1} parent=43 // pred_check
          %p696 = pneg %p229
        $region78: #{classifier_loss.1} parent=43 // pred_check_branch
          %698 = sbr.rel (%p696) target = $region80
        $region79: #{classifier_loss.1} parent=43 // pred_region
          %s700 = ssub.s32 16, 16
          %701 = vsyncadd %s680, %s700
          %s702 = smul.addr %s37, 16
          %s703 = scalar_lea.hbm %s7, %s702
          %s705 = sshll.u32 %s682, 4
          %s706 = int_to_ptr.vmem [resolvable:$true] %s705
          %708 = dma.vmem_to_hbm [thread:$0]  %s706, 16, %s703, %s680
        $region80: #{classifier_loss.1} parent=43 // pred_fallthru
          _
      $region44: #{classifier_loss.1} parent=5 // pred_fallthru
        _
      %p709 = scmp.le.s32.totalorder 2, %s28
      // Predicated region
      $region81: #{classifier_loss.1} parent=5 // pred_check
        %p710 = pneg %p709
      $region82: #{classifier_loss.1} parent=5 // pred_check_branch
        %712 = sbr.rel (%p710) target = $region84
      $region83: #{classifier_loss.1} parent=5 // pred_region
        %s713 = ssub.s32 %s28, 2
        // Predicated region
        $region85: #{classifier_loss.1} parent=83 // pred_check
          %p714 = pneg %p209
        $region86: #{classifier_loss.1} parent=83 // pred_check_branch
          %716 = sbr.rel (%p714) target = $region88
        $region87: #{classifier_loss.1} parent=83 // pred_region
          %s717 = sand.u32 %s194, 1
          %s718 = scalar_lea.sflag [#allocation4], %s717
          %s719 = sand.u32 %s194, 1
          %s720 = scalar_lea.vmem [#allocation13], %s719
          %721 = dma.done %s718, 16
        $region88: #{classifier_loss.1} parent=83 // pred_fallthru
          _
        // Predicated region
        $region89: #{classifier_loss.1} parent=83 // pred_check
          %p722 = pneg %p235
        $region90: #{classifier_loss.1} parent=83 // pred_check_branch
          %724 = sbr.rel (%p722) target = $region92
        $region91: #{classifier_loss.1} parent=83 // pred_region
          %s725 = sand.u32 %s220, 1
          %s726 = scalar_lea.sflag [#allocation15], %s725
          %s727 = sand.u32 %s220, 1
          %s728 = scalar_lea.vmem [#allocation14], %s727
          %729 = dma.done %s726, 16
        $region92: #{classifier_loss.1} parent=83 // pred_fallthru
          _
      $region84: #{classifier_loss.1} parent=5 // pred_fallthru
        _
    $region6: #{classifier_loss.1} parent=1 // loop_footer
      %s32 = sadd.s32 1, %s28
    $region7: #{classifier_loss.1} parent=1 // loop_footer_branch
      %27 = sbr.rel target = $region3
    $region8: #{classifier_loss.1} parent=1 // loop_exit
      _
    %730 = vsyncpa [#allocation3], 1
    %s731 = scalar_lea.sflag [#allocation3], 1
    %732 = vsyncpa %s731, 1
    %733 = vsyncpa [#allocation6], 1
    %s734 = scalar_lea.sflag [#allocation6], 1
    %735 = vsyncpa %s734, 1
    %736 = vsyncpa [#allocation9], 1
    %737 = vsyncpa [#allocation12], 1
    %738 = vsyncpa [#allocation4], 1
    %s739 = scalar_lea.sflag [#allocation4], 1
    %740 = vsyncpa %s739, 1
    %741 = vsyncpa [#allocation15], 1
    %s742 = scalar_lea.sflag [#allocation15], 1
    %743 = vsyncpa %s742, 1

</llo_original>
